<compile_context>
chip_gen: v7x
topology: tpu7x:2x2x1
jax: 0.10.0
libtpu: 0.0.40
codegen_flags: <defaults>
</compile_context>

<pallas_src>
import jax
import jax.numpy as jnp
from jax.experimental import pallas as pl
from jax.experimental.pallas import tpu as pltpu

LANE = 128
H1_PAD = 128   # hidden 120 padded to lane width
H2_PAD = 128   # hidden 84  padded to lane width


def _round_up(x, m):
    return ((x + m - 1) // m) * m


def _qnet_kernel(x_ref, w1_ref, b1_ref, w2_ref, b2_ref, w3_ref, b3_ref, o_ref):
    # Fused 3-layer MLP on one (TM, K) batch tile.
    # x arrives f32; cast to bf16 in-kernel (VPU has slack, kernel is mem-bound).
    x = x_ref[...].astype(jnp.bfloat16)                              # (TM, K)

    h1 = jnp.dot(x, w1_ref[...], preferred_element_type=jnp.float32)
    h1 = jnp.maximum(h1 + b1_ref[...], 0.0).astype(jnp.bfloat16)     # (TM, 128)

    h2 = jnp.dot(h1, w2_ref[...], preferred_element_type=jnp.float32)
    h2 = jnp.maximum(h2 + b2_ref[...], 0.0).astype(jnp.bfloat16)     # (TM, 128)

    out = jnp.dot(h2, w3_ref[...], preferred_element_type=jnp.float32) + b3_ref[...]
    # Store only the real output columns (masked vst); avoids padded writeback.
    o_ref[...] = out[:, : o_ref.shape[1]].astype(o_ref.dtype)        # (TM, out_dim)


def qnetwork_forward(x, params, output_dim, *, tm=512):
    """x: (B, input_dim) float32.  params: lane-padded bf16/f32 params from
    init_qnetwork_params.  Returns (B, output_dim) float32."""
    w1, b1 = params["w1"], params["b1"]
    w2, b2 = params["w2"], params["b2"]
    w3, b3 = params["w3"], params["b3"]

    B, in_dim = x.shape

    # Batch tiling: multiple of 8 sublanes.  For B > 16 rows, make >= 2 tiles so
    # v7x's two TensorCores both get work; cap tile at `tm` for DMA efficiency.
    b8 = _round_up(B, 8)
    if b8 <= 16:
        tile_m = b8
    else:
        tile_m = min(_round_up(tm, 8), _round_up(pl.cdiv(b8, 2), 8))
    b_pad = _round_up(b8, tile_m)

    if b_pad != B:
        x = jnp.pad(x, ((0, b_pad - B), (0, 0)))     # zero rows, sliced off below

    def resident(arr):
        # Full-array block, constant index_map: stays resident in VMEM across steps.
        return pl.BlockSpec(arr.shape, lambda i: (0, 0))

    out = pl.pallas_call(
        _qnet_kernel,
        out_shape=jax.ShapeDtypeStruct((b_pad, output_dim), jnp.float32),
        grid=(b_pad // tile_m,),
        in_specs=[
            pl.BlockSpec((tile_m, in_dim), lambda i: (i, 0)),   # x: tiled over batch
            resident(w1), resident(b1),
            resident(w2), resident(b2),
            resident(w3), resident(b3),
        ],
        out_specs=pl.BlockSpec((tile_m, output_dim), lambda i: (i, 0)),
        compiler_params=pltpu.CompilerParams(
            dimension_semantics=("parallel",),  # shard batch tiles across v7x's 2 TCs
        ),
    )(x, w1, b1, w2, b2, w3, b3)

    return out[:B] if b_pad != B else out


def init_qnetwork_params(key, input_dim, output_dim):
    """PyTorch nn.Linear-style init U(-1/sqrt(fan_in), +1/sqrt(fan_in)), stored
    zero-padded to lane-aligned feature dims; weights in bf16, biases in f32.
    NOTE: padded weight/bias columns must stay exactly zero if these params are
    ever updated by an optimizer."""
    out_pad = _round_up(max(output_dim, 1), LANE)
    layers = [  # (fan_in, fan_out, padded_in, padded_out)
        (input_dim, 120, input_dim, H1_PAD),
        (120, 84, H1_PAD, H2_PAD),
        (84, output_dim, H2_PAD, out_pad),
    ]
    params = {}
    for i, (fan_in, fan_out, in_p, out_p) in enumerate(layers, start=1):
        key, kw, kb = jax.random.split(key, 3)
        bound = 1.0 / (fan_in ** 0.5)
        w = jax.random.uniform(kw, (fan_in, fan_out), jnp.float32, -bound, bound)
        b = jax.random.uniform(kb, (fan_out,), jnp.float32, -bound, bound)
        w_p = jnp.zeros((in_p, out_p), jnp.float32).at[:fan_in, :fan_out].set(w)
        b_p = jnp.zeros((1, out_p), jnp.float32).at[0, :fan_out].set(b)
        params[f"w{i}"] = w_p.astype(jnp.bfloat16)
        params[f"b{i}"] = b_p
    return params


def qnetwork_reference_bf16(x, params, output_dim):
    """Plain-JAX reference with the SAME numerics as the kernel
    (bf16 casts, f32 accumulation, padded params)."""
    xb = x.astype(jnp.bfloat16)
    h = jnp.maximum(
        jnp.dot(xb, params["w1"], preferred_element_type=jnp.float32) + params["b1"], 0.0)
    h = jnp.maximum(
        jnp.dot(h.astype(jnp.bfloat16), params["w2"],
                preferred_element_type=jnp.float32) + params["b2"], 0.0)
    out = jnp.dot(h.astype(jnp.bfloat16), params["w3"],
                  preferred_element_type=jnp.float32) + params["b3"]
    return out[:, :output_dim]


def qnetwork_reference_f32(x, params, output_dim):
    """Unpadded f32 math == the PyTorch forward (up to bf16 weight rounding)."""
    w1 = params["w1"].astype(jnp.float32)[:, :120]
    b1 = params["b1"][:, :120]
    w2 = params["w2"].astype(jnp.float32)[:120, :84]
    b2 = params["b2"][:, :84]
    w3 = params["w3"].astype(jnp.float32)[:84, :output_dim]
    b3 = params["b3"][:, :output_dim]
    h = jnp.maximum(x @ w1 + b1, 0.0)
    h = jnp.maximum(h @ w2 + b2, 0.0)
    return h @ w3 + b3


if __name__ == "__main__":
    input_dim = 32   # flattened observation size
    output_dim = 8   # number of discrete actions
    batch = 37       # non-multiple of 8 to exercise batch padding + 2-tile grid

    key = jax.random.PRNGKey(0)
    key, kx = jax.random.split(key)
    params = init_qnetwork_params(key, input_dim, output_dim)
    x = jax.random.normal(kx, (batch, input_dim), jnp.float32)

    # Default tiling: 2 grid steps at this batch (>=2 tiles once B > 16).
    out = jax.block_until_ready(qnetwork_forward(x, params, output_dim))
    assert out.shape == (batch, output_dim)

    ref_b = qnetwork_reference_bf16(x, params, output_dim)
    ref_f = qnetwork_reference_f32(x, params, output_dim)
    assert jnp.allclose(out, ref_b, atol=1e-3, rtol=1e-3), "mismatch vs bf16 reference"
    assert jnp.allclose(out, ref_f, atol=1e-1, rtol=1e-1), "mismatch vs f32 reference"

    # Small tile -> multi-step batch grid (exercises pipelining + masked stores).
    out2 = jax.block_until_ready(qnetwork_forward(x, params, output_dim, tm=8))
    assert jnp.allclose(out2, ref_b, atol=1e-3, rtol=1e-3), "mismatch (tiled) vs reference"

    # Tiny act-time batch -> single-tile fast path.
    out3 = jax.block_until_ready(qnetwork_forward(x[:2], params, output_dim))
    assert out3.shape == (2, output_dim)
    assert jnp.allclose(out3, ref_b[:2], atol=1e-3, rtol=1e-3), "mismatch (tiny batch)"

    print("KERNEL_OK")
</pallas_src>

<mosaic_0001>
module attributes {stable_mosaic.version = 11 : i64} {
  func.func @_qnet_kernel(%arg0: i32, %arg1: memref<24x32xf32, #tpu.memory_space<vmem>>, %arg2: memref<32x128xbf16, #tpu.memory_space<vmem>>, %arg3: memref<1x128xf32, #tpu.memory_space<vmem>>, %arg4: memref<128x128xbf16, #tpu.memory_space<vmem>>, %arg5: memref<1x128xf32, #tpu.memory_space<vmem>>, %arg6: memref<128x128xbf16, #tpu.memory_space<vmem>>, %arg7: memref<1x128xf32, #tpu.memory_space<vmem>>, %arg8: memref<24x8xf32, #tpu.memory_space<vmem>>) attributes {dimension_semantics = [#tpu.dimension_semantics<parallel>], iteration_bounds = array<i64: 2>, scalar_prefetch = 0 : i64, scratch_operands = 0 : i64, tpu.core_type = #tpu.core_type<tc>, window_params = [{transform_indices = @transform_0, window_bounds = array<i64: 24, 32>}, {pipeline_mode = #tpu.pipeline_mode<synchronous>, transform_indices = @transform_1, window_bounds = array<i64: 32, 128>}, {pipeline_mode = #tpu.pipeline_mode<synchronous>, transform_indices = @transform_2, window_bounds = array<i64: 1, 128>}, {pipeline_mode = #tpu.pipeline_mode<synchronous>, transform_indices = @transform_3, window_bounds = array<i64: 128, 128>}, {pipeline_mode = #tpu.pipeline_mode<synchronous>, transform_indices = @transform_4, window_bounds = array<i64: 1, 128>}, {pipeline_mode = #tpu.pipeline_mode<synchronous>, transform_indices = @transform_5, window_bounds = array<i64: 128, 128>}, {pipeline_mode = #tpu.pipeline_mode<synchronous>, transform_indices = @transform_6, window_bounds = array<i64: 1, 128>}, {transform_indices = @transform_7, window_bounds = array<i64: 24, 8>}]} {
    %c0 = arith.constant 0 : index
    %c0_0 = arith.constant 0 : index
    %0 = vector.load %arg1[%c0, %c0_0] : memref<24x32xf32, #tpu.memory_space<vmem>>, vector<24x32xf32>
    %1 = arith.truncf %0 : vector<24x32xf32> to vector<24x32xbf16>
    %c0_1 = arith.constant 0 : index
    %c0_2 = arith.constant 0 : index
    %2 = vector.load %arg2[%c0_1, %c0_2] : memref<32x128xbf16, #tpu.memory_space<vmem>>, vector<32x128xbf16>
    %cst = arith.constant dense<0.000000e+00> : vector<24x128xf32>
    %3 = tpu.matmul %1, %2, %cst {dimension_numbers = #tpu.dot_dimension_numbers<[1], [0], [0], [1], [0, 0, 1, 1], [], []>} : vector<24x32xbf16>, vector<32x128xbf16>, vector<24x128xf32> -> vector<24x128xf32>
    %c0_3 = arith.constant 0 : index
    %c0_4 = arith.constant 0 : index
    %4 = vector.load %arg3[%c0_3, %c0_4] : memref<1x128xf32, #tpu.memory_space<vmem>>, vector<1x128xf32>
    %5 = vector.broadcast %4 : vector<1x128xf32> to vector<24x128xf32>
    %6 = arith.addf %3, %5 : vector<24x128xf32>
    %cst_5 = arith.constant 0.000000e+00 : f32
    %7 = vector.broadcast %cst_5 : f32 to vector<24x128xf32>
    %8 = arith.maximumf %6, %7 : vector<24x128xf32>
    %9 = arith.truncf %8 : vector<24x128xf32> to vector<24x128xbf16>
    %c0_6 = arith.constant 0 : index
    %c0_7 = arith.constant 0 : index
    %10 = vector.load %arg4[%c0_6, %c0_7] : memref<128x128xbf16, #tpu.memory_space<vmem>>, vector<128x128xbf16>
    %cst_8 = arith.constant dense<0.000000e+00> : vector<24x128xf32>
    %11 = tpu.matmul %9, %10, %cst_8 {dimension_numbers = #tpu.dot_dimension_numbers<[1], [0], [0], [1], [0, 0, 1, 1], [], []>} : vector<24x128xbf16>, vector<128x128xbf16>, vector<24x128xf32> -> vector<24x128xf32>
    %c0_9 = arith.constant 0 : index
    %c0_10 = arith.constant 0 : index
    %12 = vector.load %arg5[%c0_9, %c0_10] : memref<1x128xf32, #tpu.memory_space<vmem>>, vector<1x128xf32>
    %13 = vector.broadcast %12 : vector<1x128xf32> to vector<24x128xf32>
    %14 = arith.addf %11, %13 : vector<24x128xf32>
    %cst_11 = arith.constant 0.000000e+00 : f32
    %15 = vector.broadcast %cst_11 : f32 to vector<24x128xf32>
    %16 = arith.maximumf %14, %15 : vector<24x128xf32>
    %17 = arith.truncf %16 : vector<24x128xf32> to vector<24x128xbf16>
    %c0_12 = arith.constant 0 : index
    %c0_13 = arith.constant 0 : index
    %18 = vector.load %arg6[%c0_12, %c0_13] : memref<128x128xbf16, #tpu.memory_space<vmem>>, vector<128x128xbf16>
    %cst_14 = arith.constant dense<0.000000e+00> : vector<24x128xf32>
    %19 = tpu.matmul %17, %18, %cst_14 {dimension_numbers = #tpu.dot_dimension_numbers<[1], [0], [0], [1], [0, 0, 1, 1], [], []>} : vector<24x128xbf16>, vector<128x128xbf16>, vector<24x128xf32> -> vector<24x128xf32>
    %c0_15 = arith.constant 0 : index
    %c0_16 = arith.constant 0 : index
    %20 = vector.load %arg7[%c0_15, %c0_16] : memref<1x128xf32, #tpu.memory_space<vmem>>, vector<1x128xf32>
    %21 = vector.broadcast %20 : vector<1x128xf32> to vector<24x128xf32>
    %22 = arith.addf %19, %21 : vector<24x128xf32>
    %23 = vector.extract_strided_slice %22 {offsets = [0, 0], sizes = [24, 8], strides = [1, 1]} : vector<24x128xf32> to vector<24x8xf32>
    %c0_17 = arith.constant 0 : index
    %c0_18 = arith.constant 0 : index
    %24 = vector.load %arg8[%c0_17, %c0_18] : memref<24x8xf32, #tpu.memory_space<vmem>>, vector<24x8xf32>
    tpu.vector_store %arg8[%c0_17, %c0_18], %23 {strides = array<i32>} : memref<24x8xf32, #tpu.memory_space<vmem>>, vector<24x8xf32>,
    return
  }
  func.func @transform_0(%arg0: i32) -> (i32, i32) {
    %c0_i32 = arith.constant 0 : i32
    %c0_i32_0 = arith.constant 0 : i32
    return %arg0, %c0_i32 : i32, i32
  }
  func.func @transform_1(%arg0: i32) -> (i32, i32) {
    %c0_i32 = arith.constant 0 : i32
    %c0_i32_0 = arith.constant 0 : i32
    %c0_i32_1 = arith.constant 0 : i32
    return %c0_i32, %c0_i32_0 : i32, i32
  }
  func.func @transform_2(%arg0: i32) -> (i32, i32) {
    %c0_i32 = arith.constant 0 : i32
    %c0_i32_0 = arith.constant 0 : i32
    %c0_i32_1 = arith.constant 0 : i32
    return %c0_i32, %c0_i32_0 : i32, i32
  }
  func.func @transform_3(%arg0: i32) -> (i32, i32) {
    %c0_i32 = arith.constant 0 : i32
    %c0_i32_0 = arith.constant 0 : i32
    %c0_i32_1 = arith.constant 0 : i32
    return %c0_i32, %c0_i32_0 : i32, i32
  }
  func.func @transform_4(%arg0: i32) -> (i32, i32) {
    %c0_i32 = arith.constant 0 : i32
    %c0_i32_0 = arith.constant 0 : i32
    %c0_i32_1 = arith.constant 0 : i32
    return %c0_i32, %c0_i32_0 : i32, i32
  }
  func.func @transform_5(%arg0: i32) -> (i32, i32) {
    %c0_i32 = arith.constant 0 : i32
    %c0_i32_0 = arith.constant 0 : i32
    %c0_i32_1 = arith.constant 0 : i32
    return %c0_i32, %c0_i32_0 : i32, i32
  }
  func.func @transform_6(%arg0: i32) -> (i32, i32) {
    %c0_i32 = arith.constant 0 : i32
    %c0_i32_0 = arith.constant 0 : i32
    %c0_i32_1 = arith.constant 0 : i32
    return %c0_i32, %c0_i32_0 : i32, i32
  }
  func.func @transform_7(%arg0: i32) -> (i32, i32) {
    %c0_i32 = arith.constant 0 : i32
    %c0_i32_0 = arith.constant 0 : i32
    return %arg0, %c0_i32 : i32, i32
  }
}

</mosaic_0001>

<llo_original>
// kernel: tpu_custom_call.1
$region0: #{tpu_custom_call.1}
  #allocation0 [shape = 'u32[]', space=smem, size = 0x4, offset = 0x4, fixed_abs, tag = 'smem constant byte address 0x4 - core index']
  #allocation1 [shape = 'u32[144,128]{1,0:T(1,128)}', space=vmem, size = 0x12000, scoped, tag = 'internal scratch']
  %s0 = inlined_call_operand.vmem [shape: f32[48,32], index: 0, kind: input, shape index: {}]
  %s1 = inlined_call_operand.vmem [shape: bf16[32,128], index: 1, kind: input, shape index: {}]
  %s2 = inlined_call_operand.vmem [shape: f32[1,128], index: 2, kind: input, shape index: {}]
  %s3 = inlined_call_operand.vmem [shape: bf16[128,128], index: 3, kind: input, shape index: {}]
  %s4 = inlined_call_operand.vmem [shape: f32[1,128], index: 4, kind: input, shape index: {}]
  %s5 = inlined_call_operand.hbm [shape: bf16[128,128], index: 5, kind: input, shape index: {}]
  %s6 = inlined_call_operand.vmem [shape: f32[1,128], index: 6, kind: input, shape index: {}]
  %s7 = inlined_call_operand.vmem [shape: f32[48,8], index: 7, kind: output, shape index: {}]
  %s8 = sld [smem:[#allocation0]]
  $region65: #{tpu_custom_call.1} parent=0
    _
  %s10 = ssub.s32 1, %s8
  %s11 = scalar_select 0, %s10, %s8
  $region1: #{tpu_custom_call.1} parent=0
    #allocation2 [shape = 'u8[32768]{0}', space=vmem, size = 0x8000, scoped, tag = 'input window, operand 5, single buffered']
    #allocation3 [shape = 's32[2]{0}', space=sflag, size = 0x8, scoped, tag = 'scoped memory for tpu_custom_call.1']
    %12 = vsyncpa [#allocation3], 0
    loop: start=0, step=1, limit=4
    $region2: #{tpu_custom_call.1} parent=1 // loop_pre_header
      _
    $region3: #{tpu_custom_call.1} parent=1 // loop_header
      %s14 = sphi 0, %s18
      %p15 = scmp.ge.s32.totalorder %s14, 4
      %s24 = sphi 0, %s26
      %s27 = sphi 0, %s24
      %s28 = sphi 0, %s27
      %s44 = sphi 0, %s28
      %s48 = sphi 0, %s48
      %s50 = sphi 0, %s48
      %s51 = sphi 0, %s50
      %s65 = sphi 0, %s51
      %s69 = sphi 0, %s69
      %s71 = sphi 0, %s69
      %s72 = sphi 0, %s71
      %s86 = sphi 0, %s72
      %s90 = sphi 0, %s90
      %s92 = sphi 0, %s90
      %s93 = sphi 0, %s92
      %s107 = sphi 0, %s93
      %s111 = sphi 0, %s111
      %s113 = sphi 0, %s111
      %s114 = sphi 0, %s113
      %s128 = sphi 0, %s114
      %s132 = sphi 0, %s132
      %s134 = sphi 0, %s132
      %s135 = sphi 0, %s134
      %s149 = sphi 0, %s135
      %s153 = sphi 0, %s153
      %s155 = sphi 0, %s153
      %s156 = sphi 0, %s155
      %s170 = sphi 0, %s156
      %s176 = sphi 0, %s178
      %s179 = sphi 0, %s176
      %s180 = sphi 0, %s179
      %s196 = sphi 0, %s180
    $region4: #{tpu_custom_call.1} parent=1 // loop_header_branch
      %17 = sbr.rel (%p15) target = $region8
    $region5: #{tpu_custom_call.1} parent=1 // loop_body
      %s19 = ssub.s32 %s14, 1
      %s20 = ssub.s32 %s14, 2
      %s21 = sadd.s32 %s14, 1
      %s22 = ssub.s32 %s14, %s21
      %p23 = scmp.eq.s32.totalorder %s22, 0
      %s25 = sadd.s32 %s24, 1
      %s26 = scalar_select %p23, %s24, %s25
      %p29 = pneg %p23
      %p30 = scmp.eq.s32.totalorder %s14, 1
      %p31 = por %p29, %p30
      %p32 = scmp.ne.s32.totalorder %s24, %s27
      %p33 = scmp.eq.s32.totalorder %s14, 0
      %p34 = por %p32, %p33
      %p35 = scmp.ne.s32.totalorder %s24, %s27
      %p36 = scmp.eq.s32.totalorder %s19, 1
      %p37 = por %p35, %p36
      %p38 = scmp.ne.s32.totalorder %s27, %s28
      %p39 = scmp.eq.s32.totalorder %s19, 0
      %p40 = por %p38, %p39
      %p41 = scmp.ne.s32.totalorder %s27, %s28
      %p42 = scmp.eq.s32.totalorder %s20, 1
      %p43 = por %p41, %p42
      %p45 = scmp.ne.s32.totalorder %s28, %s44
      %p46 = scmp.eq.s32.totalorder %s20, 0
      %p47 = por %p45, %p46
      %s49 = sadd.s32 %s48, 1
      %p52 = scmp.eq.s32.totalorder %s14, 1
      %p53 = scmp.ne.s32.totalorder %s48, %s50
      %p54 = scmp.eq.s32.totalorder %s14, 0
      %p55 = por %p53, %p54
      %p56 = scmp.ne.s32.totalorder %s48, %s50
      %p57 = scmp.eq.s32.totalorder %s19, 1
      %p58 = por %p56, %p57
      %p59 = scmp.ne.s32.totalorder %s50, %s51
      %p60 = scmp.eq.s32.totalorder %s19, 0
      %p61 = por %p59, %p60
      %p62 = scmp.ne.s32.totalorder %s50, %s51
      %p63 = scmp.eq.s32.totalorder %s20, 1
      %p64 = por %p62, %p63
      %p66 = scmp.ne.s32.totalorder %s51, %s65
      %p67 = scmp.eq.s32.totalorder %s20, 0
      %p68 = por %p66, %p67
      %s70 = sadd.s32 %s69, 1
      %p73 = scmp.eq.s32.totalorder %s14, 1
      %p74 = scmp.ne.s32.totalorder %s69, %s71
      %p75 = scmp.eq.s32.totalorder %s14, 0
      %p76 = por %p74, %p75
      %p77 = scmp.ne.s32.totalorder %s69, %s71
      %p78 = scmp.eq.s32.totalorder %s19, 1
      %p79 = por %p77, %p78
      %p80 = scmp.ne.s32.totalorder %s71, %s72
      %p81 = scmp.eq.s32.totalorder %s19, 0
      %p82 = por %p80, %p81
      %p83 = scmp.ne.s32.totalorder %s71, %s72
      %p84 = scmp.eq.s32.totalorder %s20, 1
      %p85 = por %p83, %p84
      %p87 = scmp.ne.s32.totalorder %s72, %s86
      %p88 = scmp.eq.s32.totalorder %s20, 0
      %p89 = por %p87, %p88
      %s91 = sadd.s32 %s90, 1
      %p94 = scmp.eq.s32.totalorder %s14, 1
      %p95 = scmp.ne.s32.totalorder %s90, %s92
      %p96 = scmp.eq.s32.totalorder %s14, 0
      %p97 = por %p95, %p96
      %p98 = scmp.ne.s32.totalorder %s90, %s92
      %p99 = scmp.eq.s32.totalorder %s19, 1
      %p100 = por %p98, %p99
      %p101 = scmp.ne.s32.totalorder %s92, %s93
      %p102 = scmp.eq.s32.totalorder %s19, 0
      %p103 = por %p101, %p102
      %p104 = scmp.ne.s32.totalorder %s92, %s93
      %p105 = scmp.eq.s32.totalorder %s20, 1
      %p106 = por %p104, %p105
      %p108 = scmp.ne.s32.totalorder %s93, %s107
      %p109 = scmp.eq.s32.totalorder %s20, 0
      %p110 = por %p108, %p109
      %s112 = sadd.s32 %s111, 1
      %p115 = scmp.eq.s32.totalorder %s14, 1
      %p116 = scmp.ne.s32.totalorder %s111, %s113
      %p117 = scmp.eq.s32.totalorder %s14, 0
      %p118 = por %p116, %p117
      %p119 = scmp.ne.s32.totalorder %s111, %s113
      %p120 = scmp.eq.s32.totalorder %s19, 1
      %p121 = por %p119, %p120
      %p122 = scmp.ne.s32.totalorder %s113, %s114
      %p123 = scmp.eq.s32.totalorder %s19, 0
      %p124 = por %p122, %p123
      %p125 = scmp.ne.s32.totalorder %s113, %s114
      %p126 = scmp.eq.s32.totalorder %s20, 1
      %p127 = por %p125, %p126
      %p129 = scmp.ne.s32.totalorder %s114, %s128
      %p130 = scmp.eq.s32.totalorder %s20, 0
      %p131 = por %p129, %p130
      %s133 = sadd.s32 %s132, 1
      %p136 = scmp.eq.s32.totalorder %s14, 1
      %p137 = scmp.ne.s32.totalorder %s132, %s134
      %p138 = scmp.eq.s32.totalorder %s14, 0
      %p139 = por %p137, %p138
      %p140 = scmp.ne.s32.totalorder %s132, %s134
      %p141 = scmp.eq.s32.totalorder %s19, 1
      %p142 = por %p140, %p141
      %p143 = scmp.ne.s32.totalorder %s134, %s135
      %p144 = scmp.eq.s32.totalorder %s19, 0
      %p145 = por %p143, %p144
      %p146 = scmp.ne.s32.totalorder %s134, %s135
      %p147 = scmp.eq.s32.totalorder %s20, 1
      %p148 = por %p146, %p147
      %p150 = scmp.ne.s32.totalorder %s135, %s149
      %p151 = scmp.eq.s32.totalorder %s20, 0
      %p152 = por %p150, %p151
      %s154 = sadd.s32 %s153, 1
      %p157 = scmp.eq.s32.totalorder %s14, 1
      %p158 = scmp.ne.s32.totalorder %s153, %s155
      %p159 = scmp.eq.s32.totalorder %s14, 0
      %p160 = por %p158, %p159
      %p161 = scmp.ne.s32.totalorder %s153, %s155
      %p162 = scmp.eq.s32.totalorder %s19, 1
      %p163 = por %p161, %p162
      %p164 = scmp.ne.s32.totalorder %s155, %s156
      %p165 = scmp.eq.s32.totalorder %s19, 0
      %p166 = por %p164, %p165
      %p167 = scmp.ne.s32.totalorder %s155, %s156
      %p168 = scmp.eq.s32.totalorder %s20, 1
      %p169 = por %p167, %p168
      %p171 = scmp.ne.s32.totalorder %s156, %s170
      %p172 = scmp.eq.s32.totalorder %s20, 0
      %p173 = por %p171, %p172
      %s174 = ssub.s32 %s14, %s21
      %p175 = scmp.eq.s32.totalorder %s174, 0
      %s177 = sadd.s32 %s176, 1
      %s178 = scalar_select %p175, %s176, %s177
      %p181 = pneg %p175
      %p182 = scmp.eq.s32.totalorder %s14, 1
      %p183 = por %p181, %p182
      %p184 = scmp.ne.s32.totalorder %s176, %s179
      %p185 = scmp.eq.s32.totalorder %s14, 0
      %p186 = por %p184, %p185
      %p187 = scmp.ne.s32.totalorder %s176, %s179
      %p188 = scmp.eq.s32.totalorder %s19, 1
      %p189 = por %p187, %p188
      %p190 = scmp.ne.s32.totalorder %s179, %s180
      %p191 = scmp.eq.s32.totalorder %s19, 0
      %p192 = por %p190, %p191
      %p193 = scmp.ne.s32.totalorder %s179, %s180
      %p194 = scmp.eq.s32.totalorder %s20, 1
      %p195 = por %p193, %p194
      %p197 = scmp.ne.s32.totalorder %s180, %s196
      %p198 = scmp.eq.s32.totalorder %s20, 0
      %p199 = por %p197, %p198
      %p200 = scmp.le.s32.totalorder 1, %s14
      %p201 = scmp.lt.s32.totalorder %s14, 3
      %p202 = pnand %p200, %p201
      %p203 = pneg %p202
      // Predicated region
      $region9: #{tpu_custom_call.1} parent=5 // pred_check
        _
      $region10: #{tpu_custom_call.1} parent=5 // pred_check_branch
        %205 = sbr.rel (%p202) target = $region12
      $region11: #{tpu_custom_call.1} parent=5 // pred_region
        %s206 = ssub.s32 %s14, 1
        // Predicated region
        $region13: #{tpu_custom_call.1} parent=11 // pred_check
          %p207 = pneg %p61
        $region14: #{tpu_custom_call.1} parent=11 // pred_check_branch
          %209 = sbr.rel (%p207) target = $region16
        $region15: #{tpu_custom_call.1} parent=11 // pred_region
          _
        $region16: #{tpu_custom_call.1} parent=11 // pred_fallthru
          _
        // Predicated region
        $region17: #{tpu_custom_call.1} parent=11 // pred_check
          %p210 = pneg %p82
        $region18: #{tpu_custom_call.1} parent=11 // pred_check_branch
          %212 = sbr.rel (%p210) target = $region20
        $region19: #{tpu_custom_call.1} parent=11 // pred_region
          _
        $region20: #{tpu_custom_call.1} parent=11 // pred_fallthru
          _
        // Predicated region
        $region21: #{tpu_custom_call.1} parent=11 // pred_check
          %p213 = pneg %p103
        $region22: #{tpu_custom_call.1} parent=11 // pred_check_branch
          %215 = sbr.rel (%p213) target = $region24
        $region23: #{tpu_custom_call.1} parent=11 // pred_region
          _
        $region24: #{tpu_custom_call.1} parent=11 // pred_fallthru
          _
        // Predicated region
        $region25: #{tpu_custom_call.1} parent=11 // pred_check
          %p216 = pneg %p124
        $region26: #{tpu_custom_call.1} parent=11 // pred_check_branch
          %218 = sbr.rel (%p216) target = $region28
        $region27: #{tpu_custom_call.1} parent=11 // pred_region
          _
        $region28: #{tpu_custom_call.1} parent=11 // pred_fallthru
          _
        // Predicated region
        $region29: #{tpu_custom_call.1} parent=11 // pred_check
          %p219 = pneg %p145
        $region30: #{tpu_custom_call.1} parent=11 // pred_check_branch
          %221 = sbr.rel (%p219) target = $region32
        $region31: #{tpu_custom_call.1} parent=11 // pred_region
          %s223 = ssub.s32 1024, 1024
          %224 = vsyncadd [#allocation3], %s223
          %s225 = sshll.u32 [#allocation2], 4
          %s226 = int_to_ptr.vmem [resolvable:$true] %s225
          %231 = dma.hbm_to_vmem [thread:$0]  %s5, 1024, %s226, [#allocation3], 64, 64, 4
        $region32: #{tpu_custom_call.1} parent=11 // pred_fallthru
          _
        // Predicated region
        $region33: #{tpu_custom_call.1} parent=11 // pred_check
          %p232 = pneg %p166
        $region34: #{tpu_custom_call.1} parent=11 // pred_check_branch
          %234 = sbr.rel (%p232) target = $region36
        $region35: #{tpu_custom_call.1} parent=11 // pred_region
          _
        $region36: #{tpu_custom_call.1} parent=11 // pred_fallthru
          _
      $region12: #{tpu_custom_call.1} parent=5 // pred_fallthru
        _
      %p235 = scmp.lt.s32.totalorder %s14, 2
      // Predicated region
      $region37: #{tpu_custom_call.1} parent=5 // pred_check
        %p236 = pneg %p235
      $region38: #{tpu_custom_call.1} parent=5 // pred_check_branch
        %238 = sbr.rel (%p236) target = $region40
      $region39: #{tpu_custom_call.1} parent=5 // pred_region
        // Predicated region
        $region41: #{tpu_custom_call.1} parent=39 // pred_check
          %p239 = pneg %p34
        $region42: #{tpu_custom_call.1} parent=39 // pred_check_branch
          %241 = sbr.rel (%p239) target = $region44
        $region43: #{tpu_custom_call.1} parent=39 // pred_region
          %s242 = smul.u32 3, %s14
          %p243 = scmp.lt.s32.totalorder %s242, 5
          %s244 = scalar_select %p243, %s242, 5
          %s245 = smul.addr %s244, 8
          %s246 = scalar_lea.vmem %s0, %s245
          %s247 = smul.u32 3, %s14
        $region44: #{tpu_custom_call.1} parent=39 // pred_fallthru
          _
      $region40: #{tpu_custom_call.1} parent=5 // pred_fallthru
        _
      %p248 = scmp.le.s32.totalorder 1, %s14
      %p249 = scmp.lt.s32.totalorder %s14, 3
      %p250 = pnand %p248, %p249
      %p251 = pneg %p250
      // Predicated region
      $region45: #{tpu_custom_call.1} parent=5 // pred_check
        _
      $region46: #{tpu_custom_call.1} parent=5 // pred_check_branch
        %253 = sbr.rel (%p250) target = $region48
      $region47: #{tpu_custom_call.1} parent=5 // pred_region
        %s254 = ssub.s32 %s14, 1
        // Predicated region
        $region49: #{tpu_custom_call.1} parent=47 // pred_check
          %p255 = pneg %p145
        $region50: #{tpu_custom_call.1} parent=47 // pred_check_branch
          %257 = sbr.rel (%p255) target = $region52
        $region51: #{tpu_custom_call.1} parent=47 // pred_region
          %258 = dma.done [#allocation3], 1024
        $region52: #{tpu_custom_call.1} parent=47 // pred_fallthru
          _
        %s259 = smul.u32 3, %s19
        %p260 = scmp.lt.s32.totalorder %s259, 5
        %s261 = scalar_select %p260, %s259, 5
        %s262 = smul.addr %s261, 8
        %s263 = scalar_lea.vmem %s0, %s262
        %p264 = pneg %p40
        %p265 = pneg %p37
        %p266 = pneg %p61
        %p267 = pneg %p58
        %p268 = pneg %p82
        %p269 = pneg %p79
        %p270 = pneg %p103
        %p271 = pneg %p100
        %p272 = pneg %p124
        %p273 = pneg %p121
        %p274 = pneg %p145
        %p275 = pneg %p142
        %p276 = pneg %p166
        %p277 = pneg %p163
        %p278 = pneg %p192
        %p279 = pneg %p189
        %s280 = smul.u32 3, %s19
        %p281 = scmp.lt.s32.totalorder %s280, 5
        %s282 = scalar_select %p281, %s280, 5
        %s283 = smul.addr %s282, 8
        %s284 = scalar_lea.vmem %s7, %s283
        %s285 = smul.u32 3, %s19
        %p286 = scmp.lt.s32.totalorder %s285, 5
        %s287 = scalar_select %p286, %s285, 5
        %s288 = smul.addr %s287, 8
        %s289 = scalar_lea.vmem %s0, %s288
        %s290 = smul.u32 3, %s19
        %s291 = smul.u32 3, %s19
        %p292 = scmp.lt.s32.totalorder %s291, 5
        %s293 = scalar_select %p292, %s291, 5
        %s294 = smul.addr %s293, 8
        %s295 = scalar_lea.vmem %s7, %s294
        %s296 = smul.u32 3, %s19
        %v298 = vld [vmem:[%s289] sm:$0xff]
        %v299 = vld [vmem:[%s289 + $0x8] sm:$0xff]
        %v300 = vld [vmem:[%s289 + $0x10] sm:$0xff]
        %v301 = vpack.c.bf16 %v299, %v298
        %v302 = vpack.c.bf16 %v300, %v300
        %v303 = vld [vmem:[%s1] sm:$0xf]
        %v304 = vld [vmem:[%s1 + $0x4] sm:$0xf]
        %v305 = vld [vmem:[%s1 + $0x8] sm:$0xf]
        %v306 = vld [vmem:[%s1 + $0xc] sm:$0xf]
        %v307 = vld [vmem:[%s2] sm:$0x1]
        %v309 = vlaneseq
        %v310 = vshrl.u32 %v309, 7
        %v311 = vsub.s32 0, %v310
        %v312 = vrot.slane %v307, %v311
        %v318 = vunpack.c.l.b16 %v303
        %v319 = vunpack.c.l.b16 %v304
        %v320 = vunpack.c.l.b16 %v305
        %v321 = vunpack.c.l.b16 %v306
        %v322 = vpack.c.b16 %v319, %v318
        %v323 = vpack.c.b16 %v321, %v320
        %vm326 = vcmask 261120
        %v328 = vsel %vm326, %v301, 0
        %v331 = vsel %vm326, %v302, 0
        %333 = vmatprep.subr.bf16.mxu0 0
        %334 = vmatpush1.bf16.msra.mxu0 %v322
        %335 = vmatprep.subr.bf16.mxu0 0
        %336 = vmatpush1.bf16.msra.mxu0 %v323
        %337 = vmatprep.subr.bf16.mxu0 0
        %338 = vmatpush1.bf16.msra.mxu0 0
        %339 = vmatprep.subr.bf16.mxu0 0
        %340 = vmatpush1.bf16.msra.mxu0 0
        %341 = vmatprep.subr.bf16.mxu0 0
        %342 = vmatpush1.bf16.msra.mxu0 0
        %343 = vmatprep.subr.bf16.mxu0 0
        %344 = vmatpush1.bf16.msra.mxu0 0
        %345 = vmatprep.subr.bf16.mxu0 0
        %346 = vmatpush1.bf16.msra.mxu0 0
        %347 = vmatprep.subr.bf16.mxu0 0
        %348 = vmatpush1.bf16.msra.mxu0 0
        %349 = vmatprep.subr.bf16.mxu0 0
        %350 = vmatpush1.bf16.msra.mxu0 0
        %351 = vmatprep.subr.bf16.mxu0 0
        %352 = vmatpush1.bf16.msra.mxu0 0
        %353 = vmatprep.subr.bf16.mxu0 0
        %354 = vmatpush1.bf16.msra.mxu0 0
        %355 = vmatprep.subr.bf16.mxu0 0
        %356 = vmatpush1.bf16.msra.mxu0 0
        %357 = vmatprep.subr.bf16.mxu0 0
        %358 = vmatpush1.bf16.msra.mxu0 0
        %359 = vmatprep.subr.bf16.mxu0 0
        %360 = vmatpush1.bf16.msra.mxu0 0
        %361 = vmatprep.subr.bf16.mxu0 0
        %362 = vmatpush1.bf16.msra.mxu0 0
        %363 = vmatprep.subr.bf16.mxu0 0
        %364 = vmatpush1.bf16.msra.mxu0 0
        %365 = vmatprep.mubr.bf16.mxu0 0
        %366 = vmatmul.mubr.bf16.gmra.mrb[0].mxu0 %v328
        %v367 = vpop.f32.mrb[0].mxu0
        %v368 = vadd.f32 %v312, %v367
        %v369 = vpop.f32.mrb[0].mxu0
        %v370 = vpop.f32.mrb[0].mxu0
        %v371 = vadd.f32 %v312, %v370
        %v372 = vpop.f32.mrb[0].mxu0
        %373 = vmatprep.mubr.bf16.mxu0 0
        %374 = vmatmul.mubr.bf16.gmra.mrb[0].mxu0 %v331
        %v375 = vpop.f32.mrb[0].mxu0
        %v376 = vadd.f32 %v312, %v375
        %v377 = vpop.f32.mrb[0].mxu0
        %v378 = vpop.f32.mrb[0].mxu0
        %v379 = vpop.f32.mrb[0].mxu0
        %380 = vdwg.mxu0
        %v381 = vmax.f32 %v368, 0.0
        %v382 = vmax.f32 %v371, 0.0
        %v383 = vmax.f32 %v376, 0.0
        %v384 = vpack.c.bf16 %v382, %v381
        %v385 = vpack.c.bf16 %v383, %v383
        %v386 = vld [vmem:[%s3] sm:$0xf]
        %v387 = vld [vmem:[%s3 + $0x4] sm:$0xf]
        %v388 = vld [vmem:[%s3 + $0x8] sm:$0xf]
        %v389 = vld [vmem:[%s3 + $0xc] sm:$0xf]
        %v390 = vld [vmem:[%s3 + $0x10] sm:$0xf]
        %v391 = vld [vmem:[%s3 + $0x14] sm:$0xf]
        %v392 = vld [vmem:[%s3 + $0x18] sm:$0xf]
        %v393 = vld [vmem:[%s3 + $0x1c] sm:$0xf]
        %v394 = vld [vmem:[%s3 + $0x20] sm:$0xf]
        %v395 = vld [vmem:[%s3 + $0x24] sm:$0xf]
        %v396 = vld [vmem:[%s3 + $0x28] sm:$0xf]
        %v397 = vld [vmem:[%s3 + $0x2c] sm:$0xf]
        %v398 = vld [vmem:[%s3 + $0x30] sm:$0xf]
        %v399 = vld [vmem:[%s3 + $0x34] sm:$0xf]
        %v400 = vld [vmem:[%s3 + $0x38] sm:$0xf]
        %v401 = vld [vmem:[%s3 + $0x3c] sm:$0xf]
        %v402 = vld [vmem:[%s4] sm:$0x1]
        %v404 = vlaneseq
        %v405 = vshrl.u32 %v404, 7
        %v406 = vsub.s32 0, %v405
        %v407 = vrot.slane %v402, %v406
        %v425 = vunpack.c.l.b16 %v386
        %v426 = vunpack.c.l.b16 %v387
        %v427 = vunpack.c.l.b16 %v388
        %v428 = vunpack.c.l.b16 %v389
        %v429 = vunpack.c.l.b16 %v390
        %v430 = vunpack.c.l.b16 %v391
        %v431 = vunpack.c.l.b16 %v392
        %v432 = vunpack.c.l.b16 %v393
        %v433 = vunpack.c.l.b16 %v394
        %v434 = vunpack.c.l.b16 %v395
        %v435 = vunpack.c.l.b16 %v396
        %v436 = vunpack.c.l.b16 %v397
        %v437 = vunpack.c.l.b16 %v398
        %v438 = vunpack.c.l.b16 %v399
        %v439 = vunpack.c.l.b16 %v400
        %v440 = vunpack.c.l.b16 %v401
        %v441 = vpack.c.b16 %v426, %v425
        %v442 = vpack.c.b16 %v428, %v427
        %v443 = vpack.c.b16 %v430, %v429
        %v444 = vpack.c.b16 %v432, %v431
        %v445 = vpack.c.b16 %v434, %v433
        %v446 = vpack.c.b16 %v436, %v435
        %v447 = vpack.c.b16 %v438, %v437
        %v448 = vpack.c.b16 %v440, %v439
        %457 = vmatprep.subr.bf16.mxu0 0
        %458 = vmatpush1.bf16.msra.mxu0 %v441
        %459 = vmatprep.subr.bf16.mxu0 0
        %460 = vmatpush1.bf16.msra.mxu0 %v442
        %461 = vmatprep.subr.bf16.mxu0 0
        %462 = vmatpush1.bf16.msra.mxu0 %v443
        %463 = vmatprep.subr.bf16.mxu0 0
        %464 = vmatpush1.bf16.msra.mxu0 %v444
        %465 = vmatprep.subr.bf16.mxu0 0
        %466 = vmatpush1.bf16.msra.mxu0 %v445
        %467 = vmatprep.subr.bf16.mxu0 0
        %468 = vmatpush1.bf16.msra.mxu0 %v446
        %469 = vmatprep.subr.bf16.mxu0 0
        %470 = vmatpush1.bf16.msra.mxu0 %v447
        %471 = vmatprep.subr.bf16.mxu0 0
        %472 = vmatpush1.bf16.msra.mxu0 %v448
        %473 = vmatprep.subr.bf16.mxu0 0
        %474 = vmatpush1.bf16.msra.mxu0 0
        %475 = vmatprep.subr.bf16.mxu0 0
        %476 = vmatpush1.bf16.msra.mxu0 0
        %477 = vmatprep.subr.bf16.mxu0 0
        %478 = vmatpush1.bf16.msra.mxu0 0
        %479 = vmatprep.subr.bf16.mxu0 0
        %480 = vmatpush1.bf16.msra.mxu0 0
        %481 = vmatprep.subr.bf16.mxu0 0
        %482 = vmatpush1.bf16.msra.mxu0 0
        %483 = vmatprep.subr.bf16.mxu0 0
        %484 = vmatpush1.bf16.msra.mxu0 0
        %485 = vmatprep.subr.bf16.mxu0 0
        %486 = vmatpush1.bf16.msra.mxu0 0
        %487 = vmatprep.subr.bf16.mxu0 0
        %488 = vmatpush1.bf16.msra.mxu0 0
        %489 = vmatprep.mubr.bf16.mxu0 0
        %490 = vmatmul.mubr.bf16.gmra.mrb[0].mxu0 %v384
        %v491 = vpop.f32.mrb[0].mxu0
        %v492 = vadd.f32 %v407, %v491
        %v493 = vpop.f32.mrb[0].mxu0
        %v494 = vpop.f32.mrb[0].mxu0
        %v495 = vadd.f32 %v407, %v494
        %v496 = vpop.f32.mrb[0].mxu0
        %497 = vmatprep.mubr.bf16.mxu0 0
        %498 = vmatmul.mubr.bf16.gmra.mrb[0].mxu0 %v385
        %v499 = vpop.f32.mrb[0].mxu0
        %v500 = vadd.f32 %v407, %v499
        %v501 = vpop.f32.mrb[0].mxu0
        %v502 = vpop.f32.mrb[0].mxu0
        %v503 = vpop.f32.mrb[0].mxu0
        %504 = vdwg.mxu0
        %v505 = vmax.f32 %v492, 0.0
        %v506 = vmax.f32 %v495, 0.0
        %v507 = vmax.f32 %v500, 0.0
        %v508 = vpack.c.bf16 %v506, %v505
        %v509 = vpack.c.bf16 %v507, %v507
        %v510 = vld [vmem:[#allocation2] sm:$0xf]
        %v511 = vld [vmem:[#allocation2 + $0x4] sm:$0xf]
        %v512 = vld [vmem:[#allocation2 + $0x8] sm:$0xf]
        %v513 = vld [vmem:[#allocation2 + $0xc] sm:$0xf]
        %v514 = vld [vmem:[#allocation2 + $0x10] sm:$0xf]
        %v515 = vld [vmem:[#allocation2 + $0x14] sm:$0xf]
        %v516 = vld [vmem:[#allocation2 + $0x18] sm:$0xf]
        %v517 = vld [vmem:[#allocation2 + $0x1c] sm:$0xf]
        %v518 = vld [vmem:[#allocation2 + $0x20] sm:$0xf]
        %v519 = vld [vmem:[#allocation2 + $0x24] sm:$0xf]
        %v520 = vld [vmem:[#allocation2 + $0x28] sm:$0xf]
        %v521 = vld [vmem:[#allocation2 + $0x2c] sm:$0xf]
        %v522 = vld [vmem:[#allocation2 + $0x30] sm:$0xf]
        %v523 = vld [vmem:[#allocation2 + $0x34] sm:$0xf]
        %v524 = vld [vmem:[#allocation2 + $0x38] sm:$0xf]
        %v525 = vld [vmem:[#allocation2 + $0x3c] sm:$0xf]
        %v526 = vld [vmem:[%s6] sm:$0x1]
        %v528 = vlaneseq
        %v529 = vshrl.u32 %v528, 7
        %v530 = vsub.s32 0, %v529
        %v531 = vrot.slane %v526, %v530
        %v549 = vunpack.c.l.b16 %v510
        %v550 = vunpack.c.l.b16 %v511
        %v551 = vunpack.c.l.b16 %v512
        %v552 = vunpack.c.l.b16 %v513
        %v553 = vunpack.c.l.b16 %v514
        %v554 = vunpack.c.l.b16 %v515
        %v555 = vunpack.c.l.b16 %v516
        %v556 = vunpack.c.l.b16 %v517
        %v557 = vunpack.c.l.b16 %v518
        %v558 = vunpack.c.l.b16 %v519
        %v559 = vunpack.c.l.b16 %v520
        %v560 = vunpack.c.l.b16 %v521
        %v561 = vunpack.c.l.b16 %v522
        %v562 = vunpack.c.l.b16 %v523
        %v563 = vunpack.c.l.b16 %v524
        %v564 = vunpack.c.l.b16 %v525
        %v565 = vpack.c.b16 %v550, %v549
        %v566 = vpack.c.b16 %v552, %v551
        %v567 = vpack.c.b16 %v554, %v553
        %v568 = vpack.c.b16 %v556, %v555
        %v569 = vpack.c.b16 %v558, %v557
        %v570 = vpack.c.b16 %v560, %v559
        %v571 = vpack.c.b16 %v562, %v561
        %v572 = vpack.c.b16 %v564, %v563
        %581 = vmatprep.subr.bf16.mxu0 0
        %582 = vmatpush1.bf16.msra.mxu0 %v565
        %583 = vmatprep.subr.bf16.mxu0 0
        %584 = vmatpush1.bf16.msra.mxu0 %v566
        %585 = vmatprep.subr.bf16.mxu0 0
        %586 = vmatpush1.bf16.msra.mxu0 %v567
        %587 = vmatprep.subr.bf16.mxu0 0
        %588 = vmatpush1.bf16.msra.mxu0 %v568
        %589 = vmatprep.subr.bf16.mxu0 0
        %590 = vmatpush1.bf16.msra.mxu0 %v569
        %591 = vmatprep.subr.bf16.mxu0 0
        %592 = vmatpush1.bf16.msra.mxu0 %v570
        %593 = vmatprep.subr.bf16.mxu0 0
        %594 = vmatpush1.bf16.msra.mxu0 %v571
        %595 = vmatprep.subr.bf16.mxu0 0
        %596 = vmatpush1.bf16.msra.mxu0 %v572
        %597 = vmatprep.subr.bf16.mxu0 0
        %598 = vmatpush1.bf16.msra.mxu0 0
        %599 = vmatprep.subr.bf16.mxu0 0
        %600 = vmatpush1.bf16.msra.mxu0 0
        %601 = vmatprep.subr.bf16.mxu0 0
        %602 = vmatpush1.bf16.msra.mxu0 0
        %603 = vmatprep.subr.bf16.mxu0 0
        %604 = vmatpush1.bf16.msra.mxu0 0
        %605 = vmatprep.subr.bf16.mxu0 0
        %606 = vmatpush1.bf16.msra.mxu0 0
        %607 = vmatprep.subr.bf16.mxu0 0
        %608 = vmatpush1.bf16.msra.mxu0 0
        %609 = vmatprep.subr.bf16.mxu0 0
        %610 = vmatpush1.bf16.msra.mxu0 0
        %611 = vmatprep.subr.bf16.mxu0 0
        %612 = vmatpush1.bf16.msra.mxu0 0
        %613 = vmatprep.mubr.bf16.mxu0 0
        %614 = vmatmul.mubr.bf16.gmra.mrb[0].mxu0 %v508
        %v615 = vpop.f32.mrb[0].mxu0
        %v616 = vadd.f32 %v531, %v615
        %v617 = vpop.f32.mrb[0].mxu0
        %v618 = vpop.f32.mrb[0].mxu0
        %v619 = vadd.f32 %v531, %v618
        %v620 = vpop.f32.mrb[0].mxu0
        %621 = vmatprep.mubr.bf16.mxu0 0
        %622 = vmatmul.mubr.bf16.gmra.mrb[0].mxu0 %v509
        %v623 = vpop.f32.mrb[0].mxu0
        %v624 = vadd.f32 %v531, %v623
        %v625 = vpop.f32.mrb[0].mxu0
        %v626 = vpop.f32.mrb[0].mxu0
        %v627 = vpop.f32.mrb[0].mxu0
        %628 = vdwg.mxu0
        %vm629 = vcmask 64512
        %630 = vst.msk [vmem:[%s295] sm:$0xff] %vm629, %v616
        %631 = vst.msk [vmem:[%s295 + $0x8] sm:$0xff] %vm629, %v619
        %632 = vst.msk [vmem:[%s295 + $0x10] sm:$0xff] %vm629, %v624
        %s633 = smul.u32 3, %s19
        %p634 = scmp.lt.s32.totalorder %s633, 5
        %s635 = scalar_select %p634, %s633, 5
        %s636 = smul.addr %s635, 8
        %s637 = scalar_lea.vmem %s7, %s636
        // Predicated region
        $region53: #{tpu_custom_call.1} parent=47 // pred_check
          %p638 = pneg %p189
        $region54: #{tpu_custom_call.1} parent=47 // pred_check_branch
          %640 = sbr.rel (%p638) target = $region56
        $region55: #{tpu_custom_call.1} parent=47 // pred_region
          %s641 = smul.u32 3, %s19
        $region56: #{tpu_custom_call.1} parent=47 // pred_fallthru
          _
      $region48: #{tpu_custom_call.1} parent=5 // pred_fallthru
        _
      %p642 = scmp.le.s32.totalorder 2, %s14
      // Predicated region
      $region57: #{tpu_custom_call.1} parent=5 // pred_check
        %p643 = pneg %p642
      $region58: #{tpu_custom_call.1} parent=5 // pred_check_branch
        %645 = sbr.rel (%p643) target = $region60
      $region59: #{tpu_custom_call.1} parent=5 // pred_region
        %s646 = ssub.s32 %s14, 2
        // Predicated region
        $region61: #{tpu_custom_call.1} parent=59 // pred_check
          %p647 = pneg %p195
        $region62: #{tpu_custom_call.1} parent=59 // pred_check_branch
          %649 = sbr.rel (%p647) target = $region64
        $region63: #{tpu_custom_call.1} parent=59 // pred_region
          %s650 = smul.u32 3, %s20
          %p651 = scmp.lt.s32.totalorder %s650, 5
          %s652 = scalar_select %p651, %s650, 5
          %s653 = smul.addr %s652, 8
          %s654 = scalar_lea.vmem %s7, %s653
        $region64: #{tpu_custom_call.1} parent=59 // pred_fallthru
          _
      $region60: #{tpu_custom_call.1} parent=5 // pred_fallthru
        _
    $region6: #{tpu_custom_call.1} parent=1 // loop_footer
      %s18 = sadd.s32 1, %s14
    $region7: #{tpu_custom_call.1} parent=1 // loop_footer_branch
      %13 = sbr.rel target = $region3
    $region8: #{tpu_custom_call.1} parent=1 // loop_exit
      _
    %655 = vsyncpa [#allocation3], 1
    %s656 = scalar_lea.sflag [#allocation3], 1
    %657 = vsyncpa %s656, 1

</llo_original>
